<compile_context>
chip_gen: v6e
topology: v6e:2x2x1
jax: 0.10.0
libtpu: 0.0.40
codegen_flags: <defaults>
</compile_context>

<pallas_src>
import jax
import jax.numpy as jnp
from jax.experimental import pallas as pl
from jax.experimental.pallas import tpu as pltpu

LANE = 128


def make_featurenn_kernel(num_linrelu: int, matmul_dtype):
    """Kernel for: ExU -> num_linrelu x LinReLU -> Linear, batch along lanes."""

    def kernel(*refs):
        # refs layout:
        #   x (1,TB) f32 | exp(W)^T (H0,1) f32 | exu_b (1,1) SMEM |
        #   [W^T_i (fo,fi) matmul_dtype, c_i (fo,1) f32] * num_linrelu |
        #   lin_w (f_last,1) f32 | lin_b (1,1) SMEM | out (1,TB) f32
        x_ref = refs[0]
        expw_ref = refs[1]
        exu_b_ref = refs[2]
        lin_w_ref = refs[3 + 2 * num_linrelu]
        lin_b_ref = refs[4 + 2 * num_linrelu]
        o_ref = refs[5 + 2 * num_linrelu]

        x = x_ref[...]                                        # (1, TB) f32

        # --- ExU with in_features == 1: the (1, H0) matmul degenerates to an
        # outer product -> pure VPU broadcast multiply (no K=1 MXU pass).
        # relu is folded into the clamp; single cast to the matmul dtype.
        h = jnp.clip(expw_ref[...] * (x - exu_b_ref[0, 0]), 0.0, 1.0)
        h = h.astype(matmul_dtype)                            # (H0, TB)

        # --- LinReLU stack on the MXU, N = TILE_B lanes.
        # Bias folded: relu((h - b) @ W)^T == max(W^T @ h^T - (b @ W)^T, 0),
        # so subtract-c + relu + cast fuse into one pass over the f32 acc.
        for i in range(num_linrelu):
            w_ref = refs[3 + 2 * i]                           # (fo, fi)
            c_ref = refs[4 + 2 * i]                           # (fo, 1) f32
            z = jnp.dot(w_ref[...], h,
                        preferred_element_type=jnp.float32)   # (fo, TB) f32
            h = jnp.maximum(z - c_ref[...], 0.0).astype(matmul_dtype)

        # --- Final Linear (out_features == 1): sublane reduction instead of an
        # N=1 MXU matmul; output stays lane-dense f32.
        o_ref[...] = (jnp.sum(h.astype(jnp.float32) * lin_w_ref[...],
                              axis=0, keepdims=True) + lin_b_ref[0, 0])

    return kernel


def feature_nn_forward(x, params, *, tile_b=16384, matmul_dtype=jnp.bfloat16):
    """x: (B,) f32.  Returns (B, 1) f32, matching the PyTorch module.

    tile_b: batch tile (rounded to a multiple of 128).  16384 keeps per-step
            VMEM temporaries around ~8 MiB (safe on v5e/v6e/v7x) while
            amortizing per-grid-step overhead.
    matmul_dtype: bf16 (default) runs the LinReLU matmuls at full MXU rate on
            every generation (f32 accumulation kept); pass jnp.float32 for an
            exact f32 path.
    """
    (exu_w, exu_b), linrelu, (lin_w, lin_b) = (
        params["exu"], params["linrelu"], params["linear"])
    num_linrelu = len(linrelu)
    assert exu_w.shape[0] == 1, "FeatureNN operates on one feature column"

    B = x.shape[0]
    x = x.astype(jnp.float32)

    # --- Tile selection: lane-padded batch, tiles forced to multiples of 128,
    # and >= 2 tiles whenever B >= 256 so v7x's two TensorCores both get work.
    tile_b = max(LANE, pl.cdiv(tile_b, LANE) * LANE)
    bp_lane = pl.cdiv(B, LANE) * LANE
    n_tiles = pl.cdiv(bp_lane, tile_b)
    if bp_lane >= 2 * LANE:
        n_tiles = max(2, n_tiles)
    tb = pl.cdiv(pl.cdiv(bp_lane, n_tiles), LANE) * LANE
    bp = n_tiles * tb
    grid = (n_tiles,)

    x_row = jnp.zeros((1, bp), jnp.float32).at[0, :B].set(x)

    # Kernel-friendly static parameters, transformed once outside the kernel:
    # exp() hoisted, weights pre-cast to the matmul dtype, biases folded.
    exp_w_t = jnp.exp(exu_w.astype(jnp.float32)).T            # (H0, 1) f32
    exu_b_s = exu_b.astype(jnp.float32).reshape(1, 1)         # scalar -> SMEM
    lin_w_c = lin_w.astype(jnp.float32).reshape(-1, 1)        # (f_last, 1) f32
    lin_b_s = lin_b.astype(jnp.float32).reshape(1, 1)         # scalar -> SMEM

    args = [x_row, exp_w_t, exu_b_s]
    in_specs = [
        pl.BlockSpec((1, tb), lambda i: (0, i)),               # x tile
        pl.BlockSpec(exp_w_t.shape, lambda i: (0, 0)),         # exp(W)^T
        pl.BlockSpec(memory_space=pltpu.MemorySpace.SMEM),     # ExU bias
    ]
    for w, b in linrelu:
        w = jnp.asarray(w, jnp.float32)                        # (fi, fo)
        b = jnp.asarray(b, jnp.float32).reshape(1, -1)         # (1, fi)
        w_t = w.T.astype(matmul_dtype)                         # (fo, fi)
        c = (b @ w).reshape(-1, 1)                             # (fo, 1) f32
        args += [w_t, c]
        in_specs += [pl.BlockSpec(w_t.shape, lambda i: (0, 0)),
                     pl.BlockSpec(c.shape, lambda i: (0, 0))]
    args += [lin_w_c, lin_b_s]
    in_specs += [pl.BlockSpec(lin_w_c.shape, lambda i: (0, 0)),
                 pl.BlockSpec(memory_space=pltpu.MemorySpace.SMEM)]

    out = pl.pallas_call(
        make_featurenn_kernel(num_linrelu, matmul_dtype),
        out_shape=jax.ShapeDtypeStruct((1, bp), jnp.float32),
        grid=grid,
        in_specs=in_specs,
        out_specs=pl.BlockSpec((1, tb), lambda i: (0, i)),
        compiler_params=pltpu.CompilerParams(
            dimension_semantics=("parallel",),
            vmem_limit_bytes=64 * 1024 * 1024),
    )(*args)

    # Back to the module's (B, 1) output (pure layout, outside the kernel).
    return out[0, :B].reshape(B, 1)


def init_params(key, input_shape, num_units, hidden_sizes):
    """Deterministic synthetic init mirroring the PyTorch module's shapes."""
    hs = [num_units] + list(hidden_sizes)
    ks = jax.random.split(key, 4 + 2 * len(hidden_sizes))

    # ExU(input_shape, num_units)
    exu_w = 4.0 + 0.5 * jax.random.truncated_normal(
        ks[0], -2.0, 2.0, (input_shape, num_units), jnp.float32)
    exu_b = 0.5 * jax.random.truncated_normal(
        ks[1], -2.0, 2.0, (1, input_shape), jnp.float32)

    # LinReLU(hs[i], hs[i+1]): W xavier_uniform (in, out), b trunc_normal (1, in)
    linrelu = []
    for i, (fi, fo) in enumerate(zip(hs, hs[1:])):
        limit = jnp.sqrt(6.0 / (fi + fo))
        w = jax.random.uniform(ks[2 + 2 * i], (fi, fo), jnp.float32, -limit, limit)
        b = 0.5 * jax.random.truncated_normal(
            ks[3 + 2 * i], -2.0, 2.0, (1, fi), jnp.float32)
        linrelu.append((w, b))

    # nn.Linear(hs[-1], 1): stored pre-transposed as (in, 1).
    fin = hs[-1]
    limit = 1.0 / jnp.sqrt(fin)
    lin_w = jax.random.uniform(ks[-2], (fin, 1), jnp.float32, -limit, limit)
    lin_b = jax.random.uniform(ks[-1], (1, 1), jnp.float32, -limit, limit)

    return {"exu": (exu_w, exu_b), "linrelu": linrelu, "linear": (lin_w, lin_b)}


def feature_nn_reference(x, params):
    """Pure-JAX f32 reference of the PyTorch forward (dropout p=0 == identity)."""
    (exu_w, exu_b), linrelu, (lin_w, lin_b) = (
        params["exu"], params["linrelu"], params["linear"])
    h = x.reshape(-1, 1)
    h = jnp.clip(jnp.maximum((h - exu_b) @ jnp.exp(exu_w), 0.0), 0.0, 1.0)
    for w, b in linrelu:
        h = jnp.maximum((h - b) @ w, 0.0)
    return h @ lin_w + lin_b


if __name__ == "__main__":
    INPUT_SHAPE = 1          # FeatureNN operates on a single feature column
    NUM_UNITS = 32
    HIDDEN_SIZES = [64, 32]  # config.hidden_sizes

    key = jax.random.PRNGKey(0)
    kx, kp, kx2 = jax.random.split(key, 3)
    params = init_params(kp, INPUT_SHAPE, NUM_UNITS, HIDDEN_SIZES)

    # --- Small-batch path: single 128-lane-padded tile, grid=(1,).
    B = 8
    x = jax.random.normal(kx, (B,), jnp.float32)
    ref = feature_nn_reference(x, params)

    # Exact f32 matmul path: tight tolerance.
    out_f32 = jax.block_until_ready(
        feature_nn_forward(x, params, matmul_dtype=jnp.float32))
    assert out_f32.shape == (B, 1), out_f32.shape
    assert jnp.allclose(out_f32, ref, atol=1e-4, rtol=1e-4), (out_f32, ref)

    # Default bf16 matmul path (f32 accumulation): loose tolerance vs f32 ref.
    out_bf16 = jax.block_until_ready(feature_nn_forward(x, params))
    assert out_bf16.shape == (B, 1), out_bf16.shape
    assert jnp.allclose(out_bf16, ref, atol=5e-2, rtol=5e-2), (out_bf16, ref)

    # --- Gridded path: batch tiled into multiple 128-wide lane tiles
    # (grid >= 2, parallel axis), with zero padding sliced off.
    B2 = 300
    x2 = jax.random.normal(kx2, (B2,), jnp.float32)
    ref2 = feature_nn_reference(x2, params)

    out2_f32 = jax.block_until_ready(
        feature_nn_forward(x2, params, tile_b=128, matmul_dtype=jnp.float32))
    assert out2_f32.shape == (B2, 1), out2_f32.shape
    assert jnp.allclose(out2_f32, ref2, atol=1e-4, rtol=1e-4)

    out2_bf16 = jax.block_until_ready(
        feature_nn_forward(x2, params, tile_b=128))
    assert out2_bf16.shape == (B2, 1), out2_bf16.shape
    assert jnp.allclose(out2_bf16, ref2, atol=5e-2, rtol=5e-2)

    print("KERNEL_OK")
</pallas_src>

<mosaic_0001>
module attributes {stable_mosaic.version = 11 : i64} {
  func.func @kernel(%arg0: i32, %arg1: memref<1x128xf32, #tpu.memory_space<vmem>>, %arg2: memref<32x1xf32, #tpu.memory_space<vmem>>, %arg3: memref<1x1xf32, #tpu.memory_space<smem>>, %arg4: memref<64x32xf32, #tpu.memory_space<vmem>>, %arg5: memref<64x1xf32, #tpu.memory_space<vmem>>, %arg6: memref<32x64xf32, #tpu.memory_space<vmem>>, %arg7: memref<32x1xf32, #tpu.memory_space<vmem>>, %arg8: memref<32x1xf32, #tpu.memory_space<vmem>>, %arg9: memref<1x1xf32, #tpu.memory_space<smem>>, %arg10: memref<1x128xf32, #tpu.memory_space<vmem>>) attributes {dimension_semantics = [#tpu.dimension_semantics<parallel>], iteration_bounds = array<i64: 1>, scalar_prefetch = 0 : i64, scratch_operands = 0 : i64, tpu.core_type = #tpu.core_type<tc>, window_params = [{transform_indices = @transform_0, window_bounds = array<i64: 1, 128>}, {pipeline_mode = #tpu.pipeline_mode<synchronous>, transform_indices = @transform_1, window_bounds = array<i64: 32, 1>}, {transform_indices = @transform_2, window_bounds = array<i64: 1, 1>}, {pipeline_mode = #tpu.pipeline_mode<synchronous>, transform_indices = @transform_3, window_bounds = array<i64: 64, 32>}, {pipeline_mode = #tpu.pipeline_mode<synchronous>, transform_indices = @transform_4, window_bounds = array<i64: 64, 1>}, {pipeline_mode = #tpu.pipeline_mode<synchronous>, transform_indices = @transform_5, window_bounds = array<i64: 32, 64>}, {pipeline_mode = #tpu.pipeline_mode<synchronous>, transform_indices = @transform_6, window_bounds = array<i64: 32, 1>}, {pipeline_mode = #tpu.pipeline_mode<synchronous>, transform_indices = @transform_7, window_bounds = array<i64: 32, 1>}, {transform_indices = @transform_8, window_bounds = array<i64: 1, 1>}, {transform_indices = @transform_9, window_bounds = array<i64: 1, 128>}]} {
    %c0 = arith.constant 0 : index
    %c0_0 = arith.constant 0 : index
    %0 = vector.load %arg1[%c0, %c0_0] : memref<1x128xf32, #tpu.memory_space<vmem>>, vector<1x128xf32>
    %c0_1 = arith.constant 0 : index
    %c0_2 = arith.constant 0 : index
    %1 = vector.load %arg2[%c0_1, %c0_2] : memref<32x1xf32, #tpu.memory_space<vmem>>, vector<32x1xf32>
    %c0_3 = arith.constant 0 : index
    %c0_4 = arith.constant 0 : index
    %2 = memref.load %arg3[%c0_3, %c0_4] : memref<1x1xf32, #tpu.memory_space<smem>>
    %3 = vector.broadcast %2 : f32 to vector<1x128xf32>
    %4 = arith.subf %0, %3 : vector<1x128xf32>
    %5 = vector.broadcast %1 : vector<32x1xf32> to vector<32x128xf32>
    %6 = vector.broadcast %4 : vector<1x128xf32> to vector<32x128xf32>
    %7 = arith.mulf %5, %6 : vector<32x128xf32>
    %cst = arith.constant 0.000000e+00 : f32
    %cst_5 = arith.constant 1.000000e+00 : f32
    %8 = vector.broadcast %cst : f32 to vector<32x128xf32>
    %9 = arith.maximumf %8, %7 : vector<32x128xf32>
    %10 = vector.broadcast %cst_5 : f32 to vector<32x128xf32>
    %11 = arith.minimumf %10, %9 : vector<32x128xf32>
    %c0_6 = arith.constant 0 : index
    %c0_7 = arith.constant 0 : index
    %12 = vector.load %arg4[%c0_6, %c0_7] : memref<64x32xf32, #tpu.memory_space<vmem>>, vector<64x32xf32>
    %cst_8 = arith.constant dense<0.000000e+00> : vector<64x128xf32>
    %13 = tpu.matmul %12, %11, %cst_8 {dimension_numbers = #tpu.dot_dimension_numbers<[1], [0], [0], [1], [0, 0, 1, 1], [], []>} : vector<64x32xf32>, vector<32x128xf32>, vector<64x128xf32> -> vector<64x128xf32>
    %c0_9 = arith.constant 0 : index
    %c0_10 = arith.constant 0 : index
    %14 = vector.load %arg5[%c0_9, %c0_10] : memref<64x1xf32, #tpu.memory_space<vmem>>, vector<64x1xf32>
    %15 = vector.broadcast %14 : vector<64x1xf32> to vector<64x128xf32>
    %16 = arith.subf %13, %15 : vector<64x128xf32>
    %cst_11 = arith.constant 0.000000e+00 : f32
    %17 = vector.broadcast %cst_11 : f32 to vector<64x128xf32>
    %18 = arith.maximumf %16, %17 : vector<64x128xf32>
    %c0_12 = arith.constant 0 : index
    %c0_13 = arith.constant 0 : index
    %19 = vector.load %arg6[%c0_12, %c0_13] : memref<32x64xf32, #tpu.memory_space<vmem>>, vector<32x64xf32>
    %cst_14 = arith.constant dense<0.000000e+00> : vector<32x128xf32>
    %20 = tpu.matmul %19, %18, %cst_14 {dimension_numbers = #tpu.dot_dimension_numbers<[1], [0], [0], [1], [0, 0, 1, 1], [], []>} : vector<32x64xf32>, vector<64x128xf32>, vector<32x128xf32> -> vector<32x128xf32>
    %c0_15 = arith.constant 0 : index
    %c0_16 = arith.constant 0 : index
    %21 = vector.load %arg7[%c0_15, %c0_16] : memref<32x1xf32, #tpu.memory_space<vmem>>, vector<32x1xf32>
    %22 = vector.broadcast %21 : vector<32x1xf32> to vector<32x128xf32>
    %23 = arith.subf %20, %22 : vector<32x128xf32>
    %cst_17 = arith.constant 0.000000e+00 : f32
    %24 = vector.broadcast %cst_17 : f32 to vector<32x128xf32>
    %25 = arith.maximumf %23, %24 : vector<32x128xf32>
    %c0_18 = arith.constant 0 : index
    %c0_19 = arith.constant 0 : index
    %26 = vector.load %arg8[%c0_18, %c0_19] : memref<32x1xf32, #tpu.memory_space<vmem>>, vector<32x1xf32>
    %27 = vector.broadcast %26 : vector<32x1xf32> to vector<32x128xf32>
    %28 = arith.mulf %25, %27 : vector<32x128xf32>
    %cst_20 = arith.constant dense<0.000000e+00> : vector<128xf32>
    %29 = vector.multi_reduction <add>, %28, %cst_20 [0] : vector<32x128xf32> to vector<128xf32>
    %30 = vector.shape_cast %29 : vector<128xf32> to vector<1x128xf32>
    %c0_21 = arith.constant 0 : index
    %c0_22 = arith.constant 0 : index
    %31 = memref.load %arg9[%c0_21, %c0_22] : memref<1x1xf32, #tpu.memory_space<smem>>
    %32 = vector.broadcast %31 : f32 to vector<1x128xf32>
    %33 = arith.addf %30, %32 : vector<1x128xf32>
    %c0_23 = arith.constant 0 : index
    %c0_24 = arith.constant 0 : index
    %34 = vector.load %arg10[%c0_23, %c0_24] : memref<1x128xf32, #tpu.memory_space<vmem>>, vector<1x128xf32>
    tpu.vector_store %arg10[%c0_23, %c0_24], %33 {strides = array<i32>} : memref<1x128xf32, #tpu.memory_space<vmem>>, vector<1x128xf32>,
    return
  }
  func.func @transform_0(%arg0: i32) -> (i32, i32) {
    %c0_i32 = arith.constant 0 : i32
    %c0_i32_0 = arith.constant 0 : i32
    return %c0_i32, %arg0 : i32, i32
  }
  func.func @transform_1(%arg0: i32) -> (i32, i32) {
    %c0_i32 = arith.constant 0 : i32
    %c0_i32_0 = arith.constant 0 : i32
    %c0_i32_1 = arith.constant 0 : i32
    return %c0_i32, %c0_i32_0 : i32, i32
  }
  func.func @transform_2(%arg0: i32) -> (i32, i32) {
    %c0_i32 = arith.constant 0 : i32
    %c0_i32_0 = arith.constant 0 : i32
    %c0_i32_1 = arith.constant 0 : i32
    return %c0_i32, %c0_i32_0 : i32, i32
  }
  func.func @transform_3(%arg0: i32) -> (i32, i32) {
    %c0_i32 = arith.constant 0 : i32
    %c0_i32_0 = arith.constant 0 : i32
    %c0_i32_1 = arith.constant 0 : i32
    return %c0_i32, %c0_i32_0 : i32, i32
  }
  func.func @transform_4(%arg0: i32) -> (i32, i32) {
    %c0_i32 = arith.constant 0 : i32
    %c0_i32_0 = arith.constant 0 : i32
    %c0_i32_1 = arith.constant 0 : i32
    return %c0_i32, %c0_i32_0 : i32, i32
  }
  func.func @transform_5(%arg0: i32) -> (i32, i32) {
    %c0_i32 = arith.constant 0 : i32
    %c0_i32_0 = arith.constant 0 : i32
    %c0_i32_1 = arith.constant 0 : i32
    return %c0_i32, %c0_i32_0 : i32, i32
  }
  func.func @transform_6(%arg0: i32) -> (i32, i32) {
    %c0_i32 = arith.constant 0 : i32
    %c0_i32_0 = arith.constant 0 : i32
    %c0_i32_1 = arith.constant 0 : i32
    return %c0_i32, %c0_i32_0 : i32, i32
  }
  func.func @transform_7(%arg0: i32) -> (i32, i32) {
    %c0_i32 = arith.constant 0 : i32
    %c0_i32_0 = arith.constant 0 : i32
    %c0_i32_1 = arith.constant 0 : i32
    return %c0_i32, %c0_i32_0 : i32, i32
  }
  func.func @transform_8(%arg0: i32) -> (i32, i32) {
    %c0_i32 = arith.constant 0 : i32
    %c0_i32_0 = arith.constant 0 : i32
    %c0_i32_1 = arith.constant 0 : i32
    return %c0_i32, %c0_i32_0 : i32, i32
  }
  func.func @transform_9(%arg0: i32) -> (i32, i32) {
    %c0_i32 = arith.constant 0 : i32
    %c0_i32_0 = arith.constant 0 : i32
    return %c0_i32, %arg0 : i32, i32
  }
}

</mosaic_0001>

<llo_original>
// kernel: tpu_custom_call.1
$region0: #{tpu_custom_call.1}
  #allocation0 [shape = 'u32[]', space=smem, size = 0x4, offset = 0x4, fixed_abs, tag = 'smem constant byte address 0x4 - core index']
  #allocation1 [shape = 'u32[144,128]{1,0:T(1,128)}', space=vmem, size = 0x12000, scoped, tag = 'internal scratch']
  #allocation2 [shape = 'f32[1,1]{1,0:T(1,128)S(6)}', space=smem, size = 0x200, scoped, tag = 'scoped memory for tpu_custom_call.1']
  #allocation3 [shape = 'f32[1,1]{1,0:T(1,128)S(6)}', space=smem, size = 0x200, scoped, tag = 'scoped memory for tpu_custom_call.1']
  %s0 = inlined_call_operand.vmem [shape: f32[1,128], index: 0, kind: input, shape index: {}]
  %s1 = inlined_call_operand.vmem [shape: f32[32,1], index: 1, kind: input, shape index: {}]
  %s2 = inlined_call_operand.<no memory space> [shape: f32[1,1], index: 2, kind: input, shape index: {}]
  %s3 = inlined_call_operand.vmem [shape: f32[64,32], index: 3, kind: input, shape index: {}]
  %s4 = inlined_call_operand.vmem [shape: f32[64,1], index: 4, kind: input, shape index: {}]
  %s5 = inlined_call_operand.vmem [shape: f32[32,64], index: 5, kind: input, shape index: {}]
  %s6 = inlined_call_operand.vmem [shape: f32[32,1], index: 6, kind: input, shape index: {}]
  %s7 = inlined_call_operand.vmem [shape: f32[32,1], index: 7, kind: input, shape index: {}]
  %s8 = inlined_call_operand.<no memory space> [shape: f32[1,1], index: 8, kind: input, shape index: {}]
  %s9 = inlined_call_operand.hbm [shape: f32[1,128], index: 9, kind: output, shape index: {}]
  %s10 = sld [smem:[#allocation0]]
  $region46: #{tpu_custom_call.1} parent=0
    _
  %s12 = ssub.s32 1, %s10
  %s13 = scalar_select 0, %s12, %s10
  %14 = sst [smem:[#allocation2]] %s2
  %15 = sst [smem:[#allocation3]] %s8
  $region1: #{tpu_custom_call.1} parent=0
    #allocation4 [shape = 'u8[512]{0}', space=vmem, size = 0x400, scoped, tag = 'output window, operand 0, single buffered']
    #allocation5 [shape = 's32[1]{0}', space=sflag, size = 0x4, scoped, tag = 'scoped memory for tpu_custom_call.1']
    %16 = vsyncpa [#allocation5], 0
    // Predicated region
    $region2: #{tpu_custom_call.1} parent=1 // pred_check
      _
    $region3: #{tpu_custom_call.1} parent=1 // pred_check_branch
      %18 = sbr.rel (0) target = $region5
    $region4: #{tpu_custom_call.1} parent=1 // pred_region
      _
    $region5: #{tpu_custom_call.1} parent=1 // pred_fallthru
      _
    // Predicated region
    $region6: #{tpu_custom_call.1} parent=1 // pred_check
      _
    $region7: #{tpu_custom_call.1} parent=1 // pred_check_branch
      %20 = sbr.rel (0) target = $region9
    $region8: #{tpu_custom_call.1} parent=1 // pred_region
      _
    $region9: #{tpu_custom_call.1} parent=1 // pred_fallthru
      _
    // Predicated region
    $region10: #{tpu_custom_call.1} parent=1 // pred_check
      _
    $region11: #{tpu_custom_call.1} parent=1 // pred_check_branch
      %22 = sbr.rel (0) target = $region13
    $region12: #{tpu_custom_call.1} parent=1 // pred_region
      _
    $region13: #{tpu_custom_call.1} parent=1 // pred_fallthru
      _
    // Predicated region
    $region14: #{tpu_custom_call.1} parent=1 // pred_check
      _
    $region15: #{tpu_custom_call.1} parent=1 // pred_check_branch
      %24 = sbr.rel (0) target = $region17
    $region16: #{tpu_custom_call.1} parent=1 // pred_region
      _
    $region17: #{tpu_custom_call.1} parent=1 // pred_fallthru
      _
    // Predicated region
    $region18: #{tpu_custom_call.1} parent=1 // pred_check
      _
    $region19: #{tpu_custom_call.1} parent=1 // pred_check_branch
      %26 = sbr.rel (0) target = $region21
    $region20: #{tpu_custom_call.1} parent=1 // pred_region
      _
    $region21: #{tpu_custom_call.1} parent=1 // pred_fallthru
      _
    // Predicated region
    $region22: #{tpu_custom_call.1} parent=1 // pred_check
      _
    $region23: #{tpu_custom_call.1} parent=1 // pred_check_branch
      %28 = sbr.rel (0) target = $region25
    $region24: #{tpu_custom_call.1} parent=1 // pred_region
      _
    $region25: #{tpu_custom_call.1} parent=1 // pred_fallthru
      _
    // Predicated region
    $region26: #{tpu_custom_call.1} parent=1 // pred_check
      _
    $region27: #{tpu_custom_call.1} parent=1 // pred_check_branch
      %30 = sbr.rel (0) target = $region29
    $region28: #{tpu_custom_call.1} parent=1 // pred_region
      _
    $region29: #{tpu_custom_call.1} parent=1 // pred_fallthru
      _
    // Predicated region
    $region30: #{tpu_custom_call.1} parent=1 // pred_check
      _
    $region31: #{tpu_custom_call.1} parent=1 // pred_check_branch
      %32 = sbr.rel (0) target = $region33
    $region32: #{tpu_custom_call.1} parent=1 // pred_region
      _
    $region33: #{tpu_custom_call.1} parent=1 // pred_fallthru
      _
    // Predicated region
    $region34: #{tpu_custom_call.1} parent=1 // pred_check
      _
    $region35: #{tpu_custom_call.1} parent=1 // pred_check_branch
      %34 = sbr.rel (0) target = $region37
    $region36: #{tpu_custom_call.1} parent=1 // pred_region
      _
    $region37: #{tpu_custom_call.1} parent=1 // pred_fallthru
      _
    %v35 = vld [vmem:[%s0] sm:$0x1]
    %v36 = vld [vmem:[%s1] sm:$0xff]
    %v37 = vld [vmem:[%s1 + $0x8] sm:$0xff]
    %v38 = vld [vmem:[%s1 + $0x10] sm:$0xff]
    %v39 = vld [vmem:[%s1 + $0x18] sm:$0xff]
    %s40 = sld [smem:[#allocation2]]
    %v41 = vstv %s40
    %v42 = vsub.f32 %v35, %v41
    %44 = vset.pattern.permute.xlu0 0
    %45 = vperm.xlu0 %44, %v36
    %v46 = vpop.permute.xlu0 %45
    %49 = vset.pattern.permute.xlu0 0
    %50 = vperm.xlu0 %49, %v37
    %v51 = vpop.permute.xlu0 %50
    %54 = vset.pattern.permute.xlu0 0
    %55 = vperm.xlu0 %54, %v38
    %v56 = vpop.permute.xlu0 %55
    %59 = vset.pattern.permute.xlu0 0
    %60 = vperm.xlu0 %59, %v39
    %v61 = vpop.permute.xlu0 %60
    %v64 = vlaneseq
    %v65 = vshrl.u32 %v64, 7
    %v66 = vsub.s32 0, %v65
    %v67 = vrot.slane %v42, %v66
    %v69 = vmul.f32 %v46, %v67
    %v70 = vmul.f32 %v51, %v67
    %v71 = vmul.f32 %v56, %v67
    %v72 = vmul.f32 %v61, %v67
    %v73 = vmax.f32 %v69, 0.0
    %v74 = vmax.f32 %v70, 0.0
    %v75 = vmax.f32 %v71, 0.0
    %v76 = vmax.f32 %v72, 0.0
    %v77 = vmin.f32 %v73, 1.0
    %v78 = vmin.f32 %v74, 1.0
    %v79 = vmin.f32 %v75, 1.0
    %v80 = vmin.f32 %v76, 1.0
    %v81 = vld [vmem:[%s3] sm:$0xff]
    %v82 = vld [vmem:[%s3 + $0x8] sm:$0xff]
    %v83 = vld [vmem:[%s3 + $0x10] sm:$0xff]
    %v84 = vld [vmem:[%s3 + $0x18] sm:$0xff]
    %v85 = vld [vmem:[%s3 + $0x20] sm:$0xff]
    %v86 = vld [vmem:[%s3 + $0x28] sm:$0xff]
    %v87 = vld [vmem:[%s3 + $0x30] sm:$0xff]
    %v88 = vld [vmem:[%s3 + $0x38] sm:$0xff]
    %vm89 = vcmask 261120
    %v91 = vsel %vm89, %v81, 0
    %v94 = vsel %vm89, %v82, 0
    %v97 = vsel %vm89, %v83, 0
    %v100 = vsel %vm89, %v84, 0
    %v103 = vsel %vm89, %v85, 0
    %v106 = vsel %vm89, %v86, 0
    %v109 = vsel %vm89, %v87, 0
    %v112 = vsel %vm89, %v88, 0
    %114 = vmatprep.subr.mxu0 0.0
    %115 = vmatpush1.msra.mxu0 0.0
    %116 = vmatprep.subr.mxu0 0.0
    %117 = vmatpush1.msra.mxu0 0.0
    %118 = vmatprep.subr.mxu0 0.0
    %119 = vmatpush1.msra.mxu0 0.0
    %120 = vmatprep.subr.mxu0 0.0
    %121 = vmatpush1.msra.mxu0 0.0
    %122 = vmatprep.subr.mxu0 0.0
    %123 = vmatpush1.msra.mxu0 0.0
    %124 = vmatprep.subr.mxu0 0.0
    %125 = vmatpush1.msra.mxu0 0.0
    %126 = vmatprep.subr.mxu0 0.0
    %127 = vmatpush1.msra.mxu0 0.0
    %128 = vmatprep.subr.mxu0 0.0
    %129 = vmatpush1.msra.mxu0 0.0
    %130 = vmatprep.subr.mxu0 0.0
    %131 = vmatpush1.msra.mxu0 0.0
    %132 = vmatprep.subr.mxu0 0.0
    %133 = vmatpush1.msra.mxu0 0.0
    %134 = vmatprep.subr.mxu0 0.0
    %135 = vmatpush1.msra.mxu0 0.0
    %136 = vmatprep.subr.mxu0 0.0
    %137 = vmatpush1.msra.mxu0 0.0
    %138 = vmatprep.subr.mxu0 0.0
    %139 = vmatpush1.msra.mxu0 %v80
    %140 = vmatprep.subr.mxu0 0.0
    %141 = vmatpush1.msra.mxu0 %v79
    %142 = vmatprep.subr.mxu0 0.0
    %143 = vmatpush1.msra.mxu0 %v78
    %144 = vmatprep.subr.mxu0 0.0
    %145 = vmatpush1.msra.mxu0 %v77
    %146 = vmatprep.subr.mxu0 0.0
    %147 = vmatpush2.msra.mxu0 0.0
    %148 = vmatprep.subr.mxu0 0.0
    %149 = vmatpush2.msra.mxu0 0.0
    %150 = vmatprep.subr.mxu0 0.0
    %151 = vmatpush2.msra.mxu0 0.0
    %152 = vmatprep.subr.mxu0 0.0
    %153 = vmatpush2.msra.mxu0 0.0
    %154 = vmatprep.subr.mxu0 0.0
    %155 = vmatpush2.msra.mxu0 0.0
    %156 = vmatprep.subr.mxu0 0.0
    %157 = vmatpush2.msra.mxu0 0.0
    %158 = vmatprep.subr.mxu0 0.0
    %159 = vmatpush2.msra.mxu0 0.0
    %160 = vmatprep.subr.mxu0 0.0
    %161 = vmatpush2.msra.mxu0 0.0
    %162 = vmatprep.subr.mxu0 0.0
    %163 = vmatpush2.msra.mxu0 0.0
    %164 = vmatprep.subr.mxu0 0.0
    %165 = vmatpush2.msra.mxu0 0.0
    %166 = vmatprep.subr.mxu0 0.0
    %167 = vmatpush2.msra.mxu0 0.0
    %168 = vmatprep.subr.mxu0 0.0
    %169 = vmatpush2.msra.mxu0 0.0
    %170 = vmatprep.subr.mxu0 0.0
    %171 = vmatpush2.msra.mxu0 0.0
    %172 = vmatprep.subr.mxu0 0.0
    %173 = vmatpush2.msra.mxu0 0.0
    %174 = vmatprep.subr.mxu0 0.0
    %175 = vmatpush2.msra.mxu0 0.0
    %176 = vmatprep.subr.mxu0 0.0
    %177 = vmatpush2.msra.mxu0 0.0
    %178 = vmatprep.mubr.f32.mxu0 0.0
    %179 = vmatmul.mubr.f32.gmra.mxu0 %v91
    %v180 = vpop.f32.mrf.mxu0
    %v181 = vadd.f32 0.0, %v180
    %v182 = vpop.f32.mrf.mxu0
    %183 = vmatprep.mubr.f32.mxu0 0.0
    %184 = vmatmul.mubr.f32.gmra.mxu0 %v94
    %v185 = vpop.f32.mrf.mxu0
    %v186 = vadd.f32 0.0, %v185
    %v187 = vpop.f32.mrf.mxu0
    %188 = vmatprep.mubr.f32.mxu0 0.0
    %189 = vmatmul.mubr.f32.gmra.mxu0 %v97
    %v190 = vpop.f32.mrf.mxu0
    %v191 = vadd.f32 0.0, %v190
    %v192 = vpop.f32.mrf.mxu0
    %193 = vmatprep.mubr.f32.mxu0 0.0
    %194 = vmatmul.mubr.f32.gmra.mxu0 %v100
    %v195 = vpop.f32.mrf.mxu0
    %v196 = vadd.f32 0.0, %v195
    %v197 = vpop.f32.mrf.mxu0
    %198 = vmatprep.mubr.f32.mxu0 0.0
    %199 = vmatmul.mubr.f32.gmra.mxu0 %v103
    %v200 = vpop.f32.mrf.mxu0
    %v201 = vadd.f32 0.0, %v200
    %v202 = vpop.f32.mrf.mxu0
    %203 = vmatprep.mubr.f32.mxu0 0.0
    %204 = vmatmul.mubr.f32.gmra.mxu0 %v106
    %v205 = vpop.f32.mrf.mxu0
    %v206 = vadd.f32 0.0, %v205
    %v207 = vpop.f32.mrf.mxu0
    %208 = vmatprep.mubr.f32.mxu0 0.0
    %209 = vmatmul.mubr.f32.gmra.mxu0 %v109
    %v210 = vpop.f32.mrf.mxu0
    %v211 = vadd.f32 0.0, %v210
    %v212 = vpop.f32.mrf.mxu0
    %213 = vmatprep.mubr.f32.mxu0 0.0
    %214 = vmatmul.mubr.f32.gmra.mxu0 %v112
    %v215 = vpop.f32.mrf.mxu0
    %v216 = vadd.f32 0.0, %v215
    %v217 = vpop.f32.mrf.mxu0
    %218 = vdwg.mxu0
    %v219 = vld [vmem:[%s4] sm:$0xff]
    %v220 = vld [vmem:[%s4 + $0x8] sm:$0xff]
    %v221 = vld [vmem:[%s4 + $0x10] sm:$0xff]
    %v222 = vld [vmem:[%s4 + $0x18] sm:$0xff]
    %v223 = vld [vmem:[%s4 + $0x20] sm:$0xff]
    %v224 = vld [vmem:[%s4 + $0x28] sm:$0xff]
    %v225 = vld [vmem:[%s4 + $0x30] sm:$0xff]
    %v226 = vld [vmem:[%s4 + $0x38] sm:$0xff]
    %228 = vset.pattern.permute.xlu0 0
    %229 = vperm.xlu0 %228, %v219
    %v230 = vpop.permute.xlu0 %229
    %233 = vset.pattern.permute.xlu0 0
    %234 = vperm.xlu0 %233, %v220
    %v235 = vpop.permute.xlu0 %234
    %238 = vset.pattern.permute.xlu0 0
    %239 = vperm.xlu0 %238, %v221
    %v240 = vpop.permute.xlu0 %239
    %243 = vset.pattern.permute.xlu0 0
    %244 = vperm.xlu0 %243, %v222
    %v245 = vpop.permute.xlu0 %244
    %248 = vset.pattern.permute.xlu0 0
    %249 = vperm.xlu0 %248, %v223
    %v250 = vpop.permute.xlu0 %249
    %253 = vset.pattern.permute.xlu0 0
    %254 = vperm.xlu0 %253, %v224
    %v255 = vpop.permute.xlu0 %254
    %258 = vset.pattern.permute.xlu0 0
    %259 = vperm.xlu0 %258, %v225
    %v260 = vpop.permute.xlu0 %259
    %263 = vset.pattern.permute.xlu0 0
    %264 = vperm.xlu0 %263, %v226
    %v265 = vpop.permute.xlu0 %264
    %v267 = vsub.f32 %v181, %v230
    %v268 = vsub.f32 %v186, %v235
    %v269 = vsub.f32 %v191, %v240
    %v270 = vsub.f32 %v196, %v245
    %v271 = vsub.f32 %v201, %v250
    %v272 = vsub.f32 %v206, %v255
    %v273 = vsub.f32 %v211, %v260
    %v274 = vsub.f32 %v216, %v265
    %v275 = vmax.f32 %v267, 0.0
    %v276 = vmax.f32 %v268, 0.0
    %v277 = vmax.f32 %v269, 0.0
    %v278 = vmax.f32 %v270, 0.0
    %v279 = vmax.f32 %v271, 0.0
    %v280 = vmax.f32 %v272, 0.0
    %v281 = vmax.f32 %v273, 0.0
    %v282 = vmax.f32 %v274, 0.0
    %v283 = vld [vmem:[%s5] sm:$0xff]
    %v284 = vld [vmem:[%s5 + $0x8] sm:$0xff]
    %v285 = vld [vmem:[%s5 + $0x10] sm:$0xff]
    %v286 = vld [vmem:[%s5 + $0x18] sm:$0xff]
    %vm287 = vcmask 523264
    %v289 = vsel %vm287, %v283, 0
    %v292 = vsel %vm287, %v284, 0
    %v295 = vsel %vm287, %v285, 0
    %v298 = vsel %vm287, %v286, 0
    %300 = vmatprep.subr.mxu0 0.0
    %301 = vmatpush1.msra.mxu0 0.0
    %302 = vmatprep.subr.mxu0 0.0
    %303 = vmatpush1.msra.mxu0 0.0
    %304 = vmatprep.subr.mxu0 0.0
    %305 = vmatpush1.msra.mxu0 0.0
    %306 = vmatprep.subr.mxu0 0.0
    %307 = vmatpush1.msra.mxu0 0.0
    %308 = vmatprep.subr.mxu0 0.0
    %309 = vmatpush1.msra.mxu0 0.0
    %310 = vmatprep.subr.mxu0 0.0
    %311 = vmatpush1.msra.mxu0 0.0
    %312 = vmatprep.subr.mxu0 0.0
    %313 = vmatpush1.msra.mxu0 0.0
    %314 = vmatprep.subr.mxu0 0.0
    %315 = vmatpush1.msra.mxu0 0.0
    %316 = vmatprep.subr.mxu0 0.0
    %317 = vmatpush1.msra.mxu0 %v282
    %318 = vmatprep.subr.mxu0 0.0
    %319 = vmatpush1.msra.mxu0 %v281
    %320 = vmatprep.subr.mxu0 0.0
    %321 = vmatpush1.msra.mxu0 %v280
    %322 = vmatprep.subr.mxu0 0.0
    %323 = vmatpush1.msra.mxu0 %v279
    %324 = vmatprep.subr.mxu0 0.0
    %325 = vmatpush1.msra.mxu0 %v278
    %326 = vmatprep.subr.mxu0 0.0
    %327 = vmatpush1.msra.mxu0 %v277
    %328 = vmatprep.subr.mxu0 0.0
    %329 = vmatpush1.msra.mxu0 %v276
    %330 = vmatprep.subr.mxu0 0.0
    %331 = vmatpush1.msra.mxu0 %v275
    %332 = vmatprep.subr.mxu0 0.0
    %333 = vmatpush2.msra.mxu0 0.0
    %334 = vmatprep.subr.mxu0 0.0
    %335 = vmatpush2.msra.mxu0 0.0
    %336 = vmatprep.subr.mxu0 0.0
    %337 = vmatpush2.msra.mxu0 0.0
    %338 = vmatprep.subr.mxu0 0.0
    %339 = vmatpush2.msra.mxu0 0.0
    %340 = vmatprep.subr.mxu0 0.0
    %341 = vmatpush2.msra.mxu0 0.0
    %342 = vmatprep.subr.mxu0 0.0
    %343 = vmatpush2.msra.mxu0 0.0
    %344 = vmatprep.subr.mxu0 0.0
    %345 = vmatpush2.msra.mxu0 0.0
    %346 = vmatprep.subr.mxu0 0.0
    %347 = vmatpush2.msra.mxu0 0.0
    %348 = vmatprep.subr.mxu0 0.0
    %349 = vmatpush2.msra.mxu0 0.0
    %350 = vmatprep.subr.mxu0 0.0
    %351 = vmatpush2.msra.mxu0 0.0
    %352 = vmatprep.subr.mxu0 0.0
    %353 = vmatpush2.msra.mxu0 0.0
    %354 = vmatprep.subr.mxu0 0.0
    %355 = vmatpush2.msra.mxu0 0.0
    %356 = vmatprep.subr.mxu0 0.0
    %357 = vmatpush2.msra.mxu0 0.0
    %358 = vmatprep.subr.mxu0 0.0
    %359 = vmatpush2.msra.mxu0 0.0
    %360 = vmatprep.subr.mxu0 0.0
    %361 = vmatpush2.msra.mxu0 0.0
    %362 = vmatprep.subr.mxu0 0.0
    %363 = vmatpush2.msra.mxu0 0.0
    %364 = vmatprep.mubr.f32.mxu0 0.0
    %365 = vmatmul.mubr.f32.gmra.mxu0 %v289
    %v366 = vpop.f32.mrf.mxu0
    %v367 = vadd.f32 0.0, %v366
    %v368 = vpop.f32.mrf.mxu0
    %369 = vmatprep.mubr.f32.mxu0 0.0
    %370 = vmatmul.mubr.f32.gmra.mxu0 %v292
    %v371 = vpop.f32.mrf.mxu0
    %v372 = vadd.f32 0.0, %v371
    %v373 = vpop.f32.mrf.mxu0
    %374 = vmatprep.mubr.f32.mxu0 0.0
    %375 = vmatmul.mubr.f32.gmra.mxu0 %v295
    %v376 = vpop.f32.mrf.mxu0
    %v377 = vadd.f32 0.0, %v376
    %v378 = vpop.f32.mrf.mxu0
    %379 = vmatprep.mubr.f32.mxu0 0.0
    %380 = vmatmul.mubr.f32.gmra.mxu0 %v298
    %v381 = vpop.f32.mrf.mxu0
    %v382 = vadd.f32 0.0, %v381
    %v383 = vpop.f32.mrf.mxu0
    %384 = vdwg.mxu0
    %v385 = vld [vmem:[%s6] sm:$0xff]
    %v386 = vld [vmem:[%s6 + $0x8] sm:$0xff]
    %v387 = vld [vmem:[%s6 + $0x10] sm:$0xff]
    %v388 = vld [vmem:[%s6 + $0x18] sm:$0xff]
    %390 = vset.pattern.permute.xlu0 0
    %391 = vperm.xlu0 %390, %v385
    %v392 = vpop.permute.xlu0 %391
    %395 = vset.pattern.permute.xlu0 0
    %396 = vperm.xlu0 %395, %v386
    %v397 = vpop.permute.xlu0 %396
    %400 = vset.pattern.permute.xlu0 0
    %401 = vperm.xlu0 %400, %v387
    %v402 = vpop.permute.xlu0 %401
    %405 = vset.pattern.permute.xlu0 0
    %406 = vperm.xlu0 %405, %v388
    %v407 = vpop.permute.xlu0 %406
    %v409 = vsub.f32 %v367, %v392
    %v410 = vsub.f32 %v372, %v397
    %v411 = vsub.f32 %v377, %v402
    %v412 = vsub.f32 %v382, %v407
    %v413 = vmax.f32 %v409, 0.0
    %v414 = vmax.f32 %v410, 0.0
    %v415 = vmax.f32 %v411, 0.0
    %v416 = vmax.f32 %v412, 0.0
    %v417 = vld [vmem:[%s7] sm:$0xff]
    %v418 = vld [vmem:[%s7 + $0x8] sm:$0xff]
    %v419 = vld [vmem:[%s7 + $0x10] sm:$0xff]
    %v420 = vld [vmem:[%s7 + $0x18] sm:$0xff]
    %422 = vset.pattern.permute.xlu0 0
    %423 = vperm.xlu0 %422, %v417
    %v424 = vpop.permute.xlu0 %423
    %427 = vset.pattern.permute.xlu0 0
    %428 = vperm.xlu0 %427, %v418
    %v429 = vpop.permute.xlu0 %428
    %432 = vset.pattern.permute.xlu0 0
    %433 = vperm.xlu0 %432, %v419
    %v434 = vpop.permute.xlu0 %433
    %437 = vset.pattern.permute.xlu0 0
    %438 = vperm.xlu0 %437, %v420
    %v439 = vpop.permute.xlu0 %438
    %v441 = vmul.f32 %v413, %v424
    %v442 = vmul.f32 %v414, %v429
    %v443 = vmul.f32 %v415, %v434
    %v444 = vmul.f32 %v416, %v439
    %v445 = vadd.f32 %v441, %v442
    %v446 = vadd.f32 %v445, %v443
    %v447 = vadd.f32 %v446, %v444
    %v448 = vrot.slane %v447, 4
    %v449 = vadd.f32 %v447, %v448
    %v450 = vrot.slane %v449, 2
    %v451 = vadd.f32 %v449, %v450
    %v452 = vrot.slane %v451, 1
    %v453 = vadd.f32 %v451, %v452
    %s454 = sld [smem:[#allocation3]]
    %v455 = vstv %s454
    %v456 = vadd.f32 %v453, %v455
    %457 = vst [vmem:[#allocation4] sm:$0x1] %v456
    // Predicated region
    $region38: #{tpu_custom_call.1} parent=1 // pred_check
      _
    $region39: #{tpu_custom_call.1} parent=1 // pred_check_branch
      %459 = sbr.rel (0) target = $region41
    $region40: #{tpu_custom_call.1} parent=1 // pred_region
      %s461 = ssub.s32 16, 16
      %462 = vsyncadd [#allocation5], %s461
      %s464 = sshll.u32 [#allocation4], 4
      %s465 = int_to_ptr.vmem [resolvable:$true] %s464
      %467 = dma.vmem_to_hbm [thread:$0]  %s465, 16, %s9, [#allocation5]
    $region41: #{tpu_custom_call.1} parent=1 // pred_fallthru
      _
    // Predicated region
    $region42: #{tpu_custom_call.1} parent=1 // pred_check
      _
    $region43: #{tpu_custom_call.1} parent=1 // pred_check_branch
      %469 = sbr.rel (0) target = $region45
    $region44: #{tpu_custom_call.1} parent=1 // pred_region
      %470 = dma.done [#allocation5], 16
    $region45: #{tpu_custom_call.1} parent=1 // pred_fallthru
      _
    %471 = vsyncpa [#allocation5], 1

</llo_original>
